<compile_context>
chip_gen: v5e
topology: v5e:2x2
jax: 0.10.0
libtpu: 0.0.40
codegen_flags: <defaults>
</compile_context>

<pallas_src>
import functools

import jax
import jax.numpy as jnp
from jax import lax
from jax.experimental import pallas as pl
from jax.experimental.pallas import tpu as pltpu


# --------------------------------------------------------------------------
# Kernel
# --------------------------------------------------------------------------
def factored_gbm_kernel(x_ref, y_ref, wxf_ref, wyf_ref, whf_ref,
                        ib_ref, ob_ref, hb_ref,
                        xprob_ref, yprob_ref,
                        *, cditerations: int, actfun: str, mxu_dtype):
    f32 = jnp.float32

    x = x_ref[...]                       # (TB, numin_p)  f32
    y = y_ref[...]                       # (TB, numout_p) f32
    wxf = wxf_ref[...]                   # (numin_p, rank_p)  mxu_dtype
    wyf = wyf_ref[...]                   # (numout_p, rank_p) mxu_dtype
    whf = whf_ref[...]                   # (nummap_p, rank_p) mxu_dtype

    tb = x.shape[0]
    # Hoist bias broadcasts out of the CD loop (broadcast_in_dim is not CSE'd).
    ib_b = jnp.broadcast_to(ib_ref[...], (tb, ib_ref.shape[1]))
    ob_b = jnp.broadcast_to(ob_ref[...], (tb, ob_ref.shape[1]))
    hb_b = jnp.broadcast_to(hb_ref[...], (tb, hb_ref.shape[1]))

    def sigmoid(z):
        # exp -> EUP slot; approx reciprocal -> EUP slot (frees VALU slots).
        return pl.reciprocal(1.0 + jnp.exp(-z), approx=True)

    act = sigmoid if actfun == "sigmoid" else (lambda z: z)

    NN = (((1,), (0,)), ((), ()))        # a @ b
    NT = (((1,), (1,)), ((), ()))        # a @ b.T (no transpose materialized)

    def mm(a, b, dims):
        # bf16 operands on the MXU, f32 accumulation.
        return lax.dot_general(a.astype(mxu_dtype), b, dims,
                               preferred_element_type=f32)

    def hidprobs(ax, ay):
        actsxy = ax * ay                                   # f32 gating
        h = sigmoid(mm(actsxy, whf, NT) + hb_b)            # (TB, nummap_p)
        ah = mm(h, whf, NN)                                # (TB, rank_p)
        return h, ah

    def outprobs(ax, ay, ah):
        yp = act(mm(ax * ah, wyf, NT) + ob_b)              # (TB, numout_p)
        xp = act(mm(ay * ah, wxf, NT) + ib_b)              # (TB, numin_p)
        ay2 = mm(yp, wyf, NN)
        ax2 = mm(xp, wxf, NN)
        return ax2, ay2, xp, yp

    # initial factor activations
    actsx = mm(x, wxf, NN)               # (TB, rank_p)
    actsy = mm(y, wyf, NN)               # (TB, rank_p)
    _, actsh = hidprobs(actsx, actsy)

    x_probs = jnp.zeros(xprob_ref.shape, f32)
    y_probs = jnp.zeros(yprob_ref.shape, f32)

    if cditerations <= 2:
        # short loop: unroll (gives the LLO scheduler full visibility)
        for _ in range(cditerations):
            actsx, actsy, x_probs, y_probs = outprobs(actsx, actsy, actsh)
            _, actsh = hidprobs(actsx, actsy)
    else:
        # long loop: bound vreg live ranges per iteration
        def body(_, carry):
            ax, ay, ah, _, _ = carry
            ax, ay, xp, yp = outprobs(ax, ay, ah)
            _, ah = hidprobs(ax, ay)
            return ax, ay, ah, xp, yp

        actsx, actsy, actsh, x_probs, y_probs = lax.fori_loop(
            0, cditerations, body,
            (actsx, actsy, actsh, x_probs, y_probs))

    xprob_ref[...] = x_probs.astype(xprob_ref.dtype)
    yprob_ref[...] = y_probs.astype(yprob_ref.dtype)


# --------------------------------------------------------------------------
# Wrapper
# --------------------------------------------------------------------------
def _round_up(n, m):
    return ((n + m - 1) // m) * m


def factored_gbm_forward(inputs, outputs, params, *, cditerations=1,
                         actfun="sigmoid", mxu_dtype=jnp.bfloat16,
                         batch_tile=128):
    """inputs: (B, numin), outputs: (B, numout). Returns (x_probs, y_probs)."""
    wxf, wyf, whf, ib, ob, hb = params
    B, numin = inputs.shape
    _, numout = outputs.shape
    nummap = whf.shape[0]
    rank = wxf.shape[1]
    # factored GBM requires a shared factor rank
    assert wyf.shape[1] == rank and whf.shape[1] == rank

    LANE, SUB = 128, 8
    numin_p = _round_up(numin, LANE)
    numout_p = _round_up(numout, LANE)
    nummap_p = _round_up(nummap, LANE)
    rank_p = _round_up(rank, LANE)

    TB = min(batch_tile, _round_up(B, SUB))   # batch tile (sublane multiple)
    Bp = _round_up(B, TB)
    grid = (Bp // TB,)

    f32 = jnp.float32

    def pad2(a, r, c, dtype=f32):
        a = a.astype(f32)
        return jnp.pad(a, ((0, r - a.shape[0]), (0, c - a.shape[1]))).astype(dtype)

    def pad1(a, n):
        a = a.astype(f32)
        return jnp.pad(a, (0, n - a.shape[0])).reshape(1, -1)

    x_p = pad2(inputs, Bp, numin_p)
    y_p = pad2(outputs, Bp, numout_p)
    # weights pre-cast to the MXU dtype host-side (one-time cost)
    wxf_p = pad2(wxf, numin_p, rank_p, mxu_dtype)
    wyf_p = pad2(wyf, numout_p, rank_p, mxu_dtype)
    whf_p = pad2(whf, nummap_p, rank_p, mxu_dtype)
    ib_p = pad1(ib, numin_p)
    ob_p = pad1(ob, numout_p)
    hb_p = pad1(hb, nummap_p)

    batch_spec = lambda n: pl.BlockSpec((TB, n), lambda i: (i, 0))
    const_spec = lambda shape: pl.BlockSpec(shape, lambda i: (0, 0))

    kernel = functools.partial(factored_gbm_kernel,
                               cditerations=cditerations, actfun=actfun,
                               mxu_dtype=mxu_dtype)

    x_probs_p, y_probs_p = pl.pallas_call(
        kernel,
        out_shape=(
            jax.ShapeDtypeStruct((Bp, numin_p), f32),
            jax.ShapeDtypeStruct((Bp, numout_p), f32),
        ),
        grid=grid,
        in_specs=[
            batch_spec(numin_p), batch_spec(numout_p),
            const_spec(wxf_p.shape), const_spec(wyf_p.shape),
            const_spec(whf_p.shape),
            const_spec(ib_p.shape), const_spec(ob_p.shape),
            const_spec(hb_p.shape),
        ],
        out_specs=(
            batch_spec(numin_p),
            batch_spec(numout_p),
        ),
        compiler_params=pltpu.CompilerParams(
            dimension_semantics=("parallel",)),
    )(x_p, y_p, wxf_p, wyf_p, whf_p, ib_p, ob_p, hb_p)

    return x_probs_p[:B, :numin], y_probs_p[:B, :numout]


# --------------------------------------------------------------------------
# Pure-JAX reference (f32, exact sigmoid) mirroring the kernel semantics
# --------------------------------------------------------------------------
def _reference_forward(inputs, outputs, params, cditerations, actfun):
    wxf, wyf, whf, ib, ob, hb = params
    sig = jax.nn.sigmoid
    act = sig if actfun == "sigmoid" else (lambda z: z)

    actsx = inputs @ wxf
    actsy = outputs @ wyf

    def hidprobs(ax, ay):
        h = sig((ax * ay) @ whf.T + hb)
        return h, h @ whf

    _, actsh = hidprobs(actsx, actsy)
    x_probs = jnp.zeros_like(inputs)
    y_probs = jnp.zeros_like(outputs)
    for _ in range(cditerations):
        y_probs = act((actsx * actsh) @ wyf.T + ob)
        x_probs = act((actsy * actsh) @ wxf.T + ib)
        actsy = y_probs @ wyf
        actsx = x_probs @ wxf
        _, actsh = hidprobs(actsx, actsy)
    return x_probs, y_probs


if __name__ == "__main__":
    # small shapes consistent with the module (factored GBM: ranks all equal)
    batchsize = 8
    numin, numout, nummap = 32, 24, 16
    ranks = (16, 16, 16)
    alpha = 0.001

    key = jax.random.PRNGKey(0)
    k = jax.random.split(key, 8)
    wxf = jax.random.normal(k[0], (numin, ranks[0]), jnp.float32) * alpha
    wyf = jax.random.normal(k[1], (numout, ranks[1]), jnp.float32) * alpha
    whf = jax.random.normal(k[2], (nummap, ranks[2]), jnp.float32) * alpha
    ib = jnp.ones((numin,), jnp.float32) * 0.5
    ob = jnp.zeros((numout,), jnp.float32)
    hb = jnp.zeros((nummap,), jnp.float32)
    params = (wxf, wyf, whf, ib, ob, hb)

    inputs = jax.random.normal(k[3], (batchsize, numin), jnp.float32)
    outputs = jax.random.normal(k[4], (batchsize, numout), jnp.float32)

    # --- unrolled CD path (cditerations=1) ---
    x_probs, y_probs = factored_gbm_forward(
        inputs, outputs, params, cditerations=1, actfun="sigmoid")
    jax.block_until_ready((x_probs, y_probs))
    x_ref, y_ref = _reference_forward(inputs, outputs, params, 1, "sigmoid")
    assert x_probs.shape == (batchsize, numin)
    assert y_probs.shape == (batchsize, numout)
    # bf16 MXU operands + approx reciprocal sigmoid -> relaxed tolerance
    assert jnp.allclose(x_probs, x_ref, atol=5e-3, rtol=5e-3)
    assert jnp.allclose(y_probs, y_ref, atol=5e-3, rtol=5e-3)

    # --- fori_loop CD path (cditerations=3) ---
    x_probs3, y_probs3 = factored_gbm_forward(
        inputs, outputs, params, cditerations=3, actfun="sigmoid")
    jax.block_until_ready((x_probs3, y_probs3))
    x_ref3, y_ref3 = _reference_forward(inputs, outputs, params, 3, "sigmoid")
    assert jnp.allclose(x_probs3, x_ref3, atol=5e-3, rtol=5e-3)
    assert jnp.allclose(y_probs3, y_ref3, atol=5e-3, rtol=5e-3)

    print("KERNEL_OK")
</pallas_src>

<mosaic_0001>
module attributes {stable_mosaic.version = 11 : i64} {
  func.func @factored_gbm_kernel(%arg0: i32, %arg1: memref<8x128xf32, #tpu.memory_space<vmem>>, %arg2: memref<8x128xf32, #tpu.memory_space<vmem>>, %arg3: memref<128x128xbf16, #tpu.memory_space<vmem>>, %arg4: memref<128x128xbf16, #tpu.memory_space<vmem>>, %arg5: memref<128x128xbf16, #tpu.memory_space<vmem>>, %arg6: memref<1x128xf32, #tpu.memory_space<vmem>>, %arg7: memref<1x128xf32, #tpu.memory_space<vmem>>, %arg8: memref<1x128xf32, #tpu.memory_space<vmem>>, %arg9: memref<8x128xf32, #tpu.memory_space<vmem>>, %arg10: memref<8x128xf32, #tpu.memory_space<vmem>>) attributes {dimension_semantics = [#tpu.dimension_semantics<parallel>], iteration_bounds = array<i64: 1>, scalar_prefetch = 0 : i64, scratch_operands = 0 : i64, tpu.core_type = #tpu.core_type<tc>, window_params = [{transform_indices = @transform_0, window_bounds = array<i64: 8, 128>}, {transform_indices = @transform_1, window_bounds = array<i64: 8, 128>}, {pipeline_mode = #tpu.pipeline_mode<synchronous>, transform_indices = @transform_2, window_bounds = array<i64: 128, 128>}, {pipeline_mode = #tpu.pipeline_mode<synchronous>, transform_indices = @transform_3, window_bounds = array<i64: 128, 128>}, {pipeline_mode = #tpu.pipeline_mode<synchronous>, transform_indices = @transform_4, window_bounds = array<i64: 128, 128>}, {pipeline_mode = #tpu.pipeline_mode<synchronous>, transform_indices = @transform_5, window_bounds = array<i64: 1, 128>}, {pipeline_mode = #tpu.pipeline_mode<synchronous>, transform_indices = @transform_6, window_bounds = array<i64: 1, 128>}, {pipeline_mode = #tpu.pipeline_mode<synchronous>, transform_indices = @transform_7, window_bounds = array<i64: 1, 128>}, {transform_indices = @transform_8, window_bounds = array<i64: 8, 128>}, {transform_indices = @transform_9, window_bounds = array<i64: 8, 128>}]} {
    %c0 = arith.constant 0 : index
    %c0_0 = arith.constant 0 : index
    %0 = vector.load %arg1[%c0, %c0_0] : memref<8x128xf32, #tpu.memory_space<vmem>>, vector<8x128xf32>
    %c0_1 = arith.constant 0 : index
    %c0_2 = arith.constant 0 : index
    %1 = vector.load %arg2[%c0_1, %c0_2] : memref<8x128xf32, #tpu.memory_space<vmem>>, vector<8x128xf32>
    %c0_3 = arith.constant 0 : index
    %c0_4 = arith.constant 0 : index
    %2 = vector.load %arg3[%c0_3, %c0_4] : memref<128x128xbf16, #tpu.memory_space<vmem>>, vector<128x128xbf16>
    %c0_5 = arith.constant 0 : index
    %c0_6 = arith.constant 0 : index
    %3 = vector.load %arg4[%c0_5, %c0_6] : memref<128x128xbf16, #tpu.memory_space<vmem>>, vector<128x128xbf16>
    %c0_7 = arith.constant 0 : index
    %c0_8 = arith.constant 0 : index
    %4 = vector.load %arg5[%c0_7, %c0_8] : memref<128x128xbf16, #tpu.memory_space<vmem>>, vector<128x128xbf16>
    %c0_9 = arith.constant 0 : index
    %c0_10 = arith.constant 0 : index
    %5 = vector.load %arg6[%c0_9, %c0_10] : memref<1x128xf32, #tpu.memory_space<vmem>>, vector<1x128xf32>
    %6 = vector.shape_cast %5 : vector<1x128xf32> to vector<1x128xf32>
    %7 = vector.broadcast %6 : vector<1x128xf32> to vector<8x128xf32>
    %c0_11 = arith.constant 0 : index
    %c0_12 = arith.constant 0 : index
    %8 = vector.load %arg7[%c0_11, %c0_12] : memref<1x128xf32, #tpu.memory_space<vmem>>, vector<1x128xf32>
    %9 = vector.shape_cast %8 : vector<1x128xf32> to vector<1x128xf32>
    %10 = vector.broadcast %9 : vector<1x128xf32> to vector<8x128xf32>
    %c0_13 = arith.constant 0 : index
    %c0_14 = arith.constant 0 : index
    %11 = vector.load %arg8[%c0_13, %c0_14] : memref<1x128xf32, #tpu.memory_space<vmem>>, vector<1x128xf32>
    %12 = vector.shape_cast %11 : vector<1x128xf32> to vector<1x128xf32>
    %13 = vector.broadcast %12 : vector<1x128xf32> to vector<8x128xf32>
    %14 = arith.truncf %0 : vector<8x128xf32> to vector<8x128xbf16>
    %cst = arith.constant dense<0.000000e+00> : vector<8x128xf32>
    %15 = tpu.matmul %14, %2, %cst {dimension_numbers = #tpu.dot_dimension_numbers<[1], [0], [0], [1], [0, 0, 1, 1], [], []>} : vector<8x128xbf16>, vector<128x128xbf16>, vector<8x128xf32> -> vector<8x128xf32>
    %16 = arith.truncf %1 : vector<8x128xf32> to vector<8x128xbf16>
    %cst_15 = arith.constant dense<0.000000e+00> : vector<8x128xf32>
    %17 = tpu.matmul %16, %3, %cst_15 {dimension_numbers = #tpu.dot_dimension_numbers<[1], [0], [0], [1], [0, 0, 1, 1], [], []>} : vector<8x128xbf16>, vector<128x128xbf16>, vector<8x128xf32> -> vector<8x128xf32>
    %18 = arith.mulf %15, %17 : vector<8x128xf32>
    %19 = arith.truncf %18 : vector<8x128xf32> to vector<8x128xbf16>
    %cst_16 = arith.constant dense<0.000000e+00> : vector<8x128xf32>
    %20 = tpu.matmul %19, %4, %cst_16 {dimension_numbers = #tpu.dot_dimension_numbers<[1], [1], [0], [0], [0, 0, 1, 0], [], []>} : vector<8x128xbf16>, vector<128x128xbf16>, vector<8x128xf32> -> vector<8x128xf32>
    %21 = arith.addf %20, %13 : vector<8x128xf32>
    %cst_17 = arith.constant 0.000000e+00 : f32
    %22 = vector.broadcast %cst_17 : f32 to vector<8x128xf32>
    %23 = arith.subf %22, %21 : vector<8x128xf32>
    %24 = math.exp %23 : vector<8x128xf32>
    %cst_18 = arith.constant 1.000000e+00 : f32
    %25 = vector.broadcast %cst_18 : f32 to vector<8x128xf32>
    %26 = arith.addf %25, %24 : vector<8x128xf32>
    %27 = tpu.reciprocal %26 {approx = true} : vector<8x128xf32> -> vector<8x128xf32>
    %28 = arith.truncf %27 : vector<8x128xf32> to vector<8x128xbf16>
    %cst_19 = arith.constant dense<0.000000e+00> : vector<8x128xf32>
    %29 = tpu.matmul %28, %4, %cst_19 {dimension_numbers = #tpu.dot_dimension_numbers<[1], [0], [0], [1], [0, 0, 1, 1], [], []>} : vector<8x128xbf16>, vector<128x128xbf16>, vector<8x128xf32> -> vector<8x128xf32>
    %30 = arith.mulf %15, %29 : vector<8x128xf32>
    %31 = arith.truncf %30 : vector<8x128xf32> to vector<8x128xbf16>
    %cst_20 = arith.constant dense<0.000000e+00> : vector<8x128xf32>
    %32 = tpu.matmul %31, %3, %cst_20 {dimension_numbers = #tpu.dot_dimension_numbers<[1], [1], [0], [0], [0, 0, 1, 0], [], []>} : vector<8x128xbf16>, vector<128x128xbf16>, vector<8x128xf32> -> vector<8x128xf32>
    %33 = arith.addf %32, %10 : vector<8x128xf32>
    %cst_21 = arith.constant 0.000000e+00 : f32
    %34 = vector.broadcast %cst_21 : f32 to vector<8x128xf32>
    %35 = arith.subf %34, %33 : vector<8x128xf32>
    %36 = math.exp %35 : vector<8x128xf32>
    %cst_22 = arith.constant 1.000000e+00 : f32
    %37 = vector.broadcast %cst_22 : f32 to vector<8x128xf32>
    %38 = arith.addf %37, %36 : vector<8x128xf32>
    %39 = tpu.reciprocal %38 {approx = true} : vector<8x128xf32> -> vector<8x128xf32>
    %40 = arith.mulf %17, %29 : vector<8x128xf32>
    %41 = arith.truncf %40 : vector<8x128xf32> to vector<8x128xbf16>
    %cst_23 = arith.constant dense<0.000000e+00> : vector<8x128xf32>
    %42 = tpu.matmul %41, %2, %cst_23 {dimension_numbers = #tpu.dot_dimension_numbers<[1], [1], [0], [0], [0, 0, 1, 0], [], []>} : vector<8x128xbf16>, vector<128x128xbf16>, vector<8x128xf32> -> vector<8x128xf32>
    %43 = arith.addf %42, %7 : vector<8x128xf32>
    %cst_24 = arith.constant 0.000000e+00 : f32
    %44 = vector.broadcast %cst_24 : f32 to vector<8x128xf32>
    %45 = arith.subf %44, %43 : vector<8x128xf32>
    %46 = math.exp %45 : vector<8x128xf32>
    %cst_25 = arith.constant 1.000000e+00 : f32
    %47 = vector.broadcast %cst_25 : f32 to vector<8x128xf32>
    %48 = arith.addf %47, %46 : vector<8x128xf32>
    %49 = tpu.reciprocal %48 {approx = true} : vector<8x128xf32> -> vector<8x128xf32>
    %c0_26 = arith.constant 0 : index
    %c0_27 = arith.constant 0 : index
    %50 = vector.load %arg9[%c0_26, %c0_27] : memref<8x128xf32, #tpu.memory_space<vmem>>, vector<8x128xf32>
    tpu.vector_store %arg9[%c0_26, %c0_27], %49 {strides = array<i32>} : memref<8x128xf32, #tpu.memory_space<vmem>>, vector<8x128xf32>,
    %c0_28 = arith.constant 0 : index
    %c0_29 = arith.constant 0 : index
    %51 = vector.load %arg10[%c0_28, %c0_29] : memref<8x128xf32, #tpu.memory_space<vmem>>, vector<8x128xf32>
    tpu.vector_store %arg10[%c0_28, %c0_29], %39 {strides = array<i32>} : memref<8x128xf32, #tpu.memory_space<vmem>>, vector<8x128xf32>,
    return
  }
  func.func @transform_0(%arg0: i32) -> (i32, i32) {
    %c0_i32 = arith.constant 0 : i32
    %c0_i32_0 = arith.constant 0 : i32
    return %arg0, %c0_i32 : i32, i32
  }
  func.func @transform_1(%arg0: i32) -> (i32, i32) {
    %c0_i32 = arith.constant 0 : i32
    %c0_i32_0 = arith.constant 0 : i32
    return %arg0, %c0_i32 : i32, i32
  }
  func.func @transform_2(%arg0: i32) -> (i32, i32) {
    %c0_i32 = arith.constant 0 : i32
    %c0_i32_0 = arith.constant 0 : i32
    %c0_i32_1 = arith.constant 0 : i32
    return %c0_i32, %c0_i32_0 : i32, i32
  }
  func.func @transform_3(%arg0: i32) -> (i32, i32) {
    %c0_i32 = arith.constant 0 : i32
    %c0_i32_0 = arith.constant 0 : i32
    %c0_i32_1 = arith.constant 0 : i32
    return %c0_i32, %c0_i32_0 : i32, i32
  }
  func.func @transform_4(%arg0: i32) -> (i32, i32) {
    %c0_i32 = arith.constant 0 : i32
    %c0_i32_0 = arith.constant 0 : i32
    %c0_i32_1 = arith.constant 0 : i32
    return %c0_i32, %c0_i32_0 : i32, i32
  }
  func.func @transform_5(%arg0: i32) -> (i32, i32) {
    %c0_i32 = arith.constant 0 : i32
    %c0_i32_0 = arith.constant 0 : i32
    %c0_i32_1 = arith.constant 0 : i32
    return %c0_i32, %c0_i32_0 : i32, i32
  }
  func.func @transform_6(%arg0: i32) -> (i32, i32) {
    %c0_i32 = arith.constant 0 : i32
    %c0_i32_0 = arith.constant 0 : i32
    %c0_i32_1 = arith.constant 0 : i32
    return %c0_i32, %c0_i32_0 : i32, i32
  }
  func.func @transform_7(%arg0: i32) -> (i32, i32) {
    %c0_i32 = arith.constant 0 : i32
    %c0_i32_0 = arith.constant 0 : i32
    %c0_i32_1 = arith.constant 0 : i32
    return %c0_i32, %c0_i32_0 : i32, i32
  }
  func.func @transform_8(%arg0: i32) -> (i32, i32) {
    %c0_i32 = arith.constant 0 : i32
    %c0_i32_0 = arith.constant 0 : i32
    return %arg0, %c0_i32 : i32, i32
  }
  func.func @transform_9(%arg0: i32) -> (i32, i32) {
    %c0_i32 = arith.constant 0 : i32
    %c0_i32_0 = arith.constant 0 : i32
    return %arg0, %c0_i32 : i32, i32
  }
}

</mosaic_0001>

<llo_original>
// kernel: tpu_custom_call.1
$region0: #{tpu_custom_call.1}
  #allocation0 [shape = 'u32[]', space=smem, size = 0x4, offset = 0x4, fixed_abs, tag = 'smem constant byte address 0x4 - core index']
  #allocation1 [shape = 'u32[72,128]{1,0:T(1,128)}', space=vmem, size = 0x9000, scoped, tag = 'internal scratch']
  %s0 = inlined_call_operand.hbm [shape: f32[8,128], index: 0, kind: input, shape index: {}]
  %s1 = inlined_call_operand.hbm [shape: f32[8,128], index: 1, kind: input, shape index: {}]
  %s2 = inlined_call_operand.hbm [shape: bf16[128,128], index: 2, kind: input, shape index: {}]
  %s3 = inlined_call_operand.hbm [shape: bf16[128,128], index: 3, kind: input, shape index: {}]
  %s4 = inlined_call_operand.hbm [shape: bf16[128,128], index: 4, kind: input, shape index: {}]
  %s5 = inlined_call_operand.vmem [shape: f32[1,128], index: 5, kind: input, shape index: {}]
  %s6 = inlined_call_operand.vmem [shape: f32[1,128], index: 6, kind: input, shape index: {}]
  %s7 = inlined_call_operand.vmem [shape: f32[1,128], index: 7, kind: input, shape index: {}]
  %s8 = inlined_call_operand.hbm [shape: f32[8,128], index: 8, kind: output, shape index: {0}]
  %s9 = inlined_call_operand.hbm [shape: f32[8,128], index: 9, kind: output, shape index: {1}]
  %10 = xla_tuple %s8, %s9
  %s11 = sld [smem:[#allocation0]]
  $region70: #{tpu_custom_call.1} parent=0
    _
  %s13 = ssub.s32 1, %s11
  %s14 = scalar_select 0, %s13, %s11
  $region1: #{tpu_custom_call.1} parent=0
    #allocation2 [shape = 'u8[4096]{0}', space=vmem, size = 0x1000, scoped, tag = 'input window, operand 0, single buffered']
    #allocation3 [shape = 's32[1]{0}', space=sflag, size = 0x4, scoped, tag = 'scoped memory for tpu_custom_call.1']
    #allocation4 [shape = 's32[1]{0}', space=sflag, size = 0x4, scoped, tag = 'scoped memory for tpu_custom_call.1']
    #allocation5 [shape = 'u8[4096]{0}', space=vmem, size = 0x1000, scoped, tag = 'input window, operand 1, single buffered']
    #allocation6 [shape = 's32[1]{0}', space=sflag, size = 0x4, scoped, tag = 'scoped memory for tpu_custom_call.1']
    #allocation7 [shape = 'u8[32768]{0}', space=vmem, size = 0x8000, scoped, tag = 'input window, operand 2, single buffered']
    #allocation8 [shape = 'u8[32768]{0}', space=vmem, size = 0x8000, scoped, tag = 'input window, operand 3, single buffered']
    #allocation9 [shape = 's32[1]{0}', space=sflag, size = 0x4, scoped, tag = 'scoped memory for tpu_custom_call.1']
    #allocation10 [shape = 'u8[32768]{0}', space=vmem, size = 0x8000, scoped, tag = 'input window, operand 4, single buffered']
    #allocation11 [shape = 'u8[4096]{0}', space=vmem, size = 0x1000, scoped, tag = 'output window, operand 0, single buffered']
    #allocation12 [shape = 'u8[4096]{0}', space=vmem, size = 0x1000, scoped, tag = 'output window, operand 1, single buffered']
    #allocation13 [shape = 's32[1]{0}', space=sflag, size = 0x4, scoped, tag = 'scoped memory for tpu_custom_call.1']
    %15 = vsyncpa [#allocation3], 0
    %16 = vsyncpa [#allocation6], 0
    %17 = vsyncpa [#allocation9], 0
    %18 = vsyncpa [#allocation4], 0
    %19 = vsyncpa [#allocation13], 0
    // Predicated region
    $region2: #{tpu_custom_call.1} parent=1 // pred_check
      _
    $region3: #{tpu_custom_call.1} parent=1 // pred_check_branch
      %21 = sbr.rel (0) target = $region5
    $region4: #{tpu_custom_call.1} parent=1 // pred_region
      %23 = vsyncadd [#allocation3], 0
      %s25 = sshll.u32 %s0, 4
      %s26 = int_to_ptr.hbm [resolvable:$true] %s25
      %s27 = sshll.u32 [#allocation2], 4
      %s28 = int_to_ptr.vmem [resolvable:$true] %s27
      %30 = dma.hbm_to_vmem [thread:$0]  %s26, 128, %s28, [#allocation3]
    $region5: #{tpu_custom_call.1} parent=1 // pred_fallthru
      _
    // Predicated region
    $region6: #{tpu_custom_call.1} parent=1 // pred_check
      _
    $region7: #{tpu_custom_call.1} parent=1 // pred_check_branch
      %32 = sbr.rel (0) target = $region9
    $region8: #{tpu_custom_call.1} parent=1 // pred_region
      %34 = vsyncadd [#allocation6], 0
      %s36 = sshll.u32 %s1, 4
      %s37 = int_to_ptr.hbm [resolvable:$true] %s36
      %s38 = sshll.u32 [#allocation5], 4
      %s39 = int_to_ptr.vmem [resolvable:$true] %s38
      %41 = dma.hbm_to_vmem [thread:$0]  %s37, 128, %s39, [#allocation6]
    $region9: #{tpu_custom_call.1} parent=1 // pred_fallthru
      _
    // Predicated region
    $region10: #{tpu_custom_call.1} parent=1 // pred_check
      _
    $region11: #{tpu_custom_call.1} parent=1 // pred_check_branch
      %43 = sbr.rel (0) target = $region13
    $region12: #{tpu_custom_call.1} parent=1 // pred_region
      %45 = vsyncadd [#allocation6], 0
      %s46 = sshll.u32 %s2, 4
      %s47 = int_to_ptr.hbm [resolvable:$true] %s46
      %s48 = sshll.u32 [#allocation7], 4
      %s49 = int_to_ptr.vmem [resolvable:$true] %s48
      %54 = dma.hbm_to_vmem [thread:$0]  %s47, 1024, %s49, [#allocation6], 64, 64, 4
    $region13: #{tpu_custom_call.1} parent=1 // pred_fallthru
      _
    // Predicated region
    $region14: #{tpu_custom_call.1} parent=1 // pred_check
      _
    $region15: #{tpu_custom_call.1} parent=1 // pred_check_branch
      %56 = sbr.rel (0) target = $region17
    $region16: #{tpu_custom_call.1} parent=1 // pred_region
      %58 = vsyncadd [#allocation9], 0
      %s59 = sshll.u32 %s3, 4
      %s60 = int_to_ptr.hbm [resolvable:$true] %s59
      %s61 = sshll.u32 [#allocation8], 4
      %s62 = int_to_ptr.vmem [resolvable:$true] %s61
      %67 = dma.hbm_to_vmem [thread:$0]  %s60, 1024, %s62, [#allocation9], 64, 64, 4
    $region17: #{tpu_custom_call.1} parent=1 // pred_fallthru
      _
    // Predicated region
    $region18: #{tpu_custom_call.1} parent=1 // pred_check
      _
    $region19: #{tpu_custom_call.1} parent=1 // pred_check_branch
      %69 = sbr.rel (0) target = $region21
    $region20: #{tpu_custom_call.1} parent=1 // pred_region
      %71 = vsyncadd [#allocation9], 0
      %s72 = sshll.u32 %s4, 4
      %s73 = int_to_ptr.hbm [resolvable:$true] %s72
      %s74 = sshll.u32 [#allocation10], 4
      %s75 = int_to_ptr.vmem [resolvable:$true] %s74
      %80 = dma.hbm_to_vmem [thread:$0]  %s73, 1024, %s75, [#allocation9], 64, 64, 4
    $region21: #{tpu_custom_call.1} parent=1 // pred_fallthru
      _
    // Predicated region
    $region22: #{tpu_custom_call.1} parent=1 // pred_check
      _
    $region23: #{tpu_custom_call.1} parent=1 // pred_check_branch
      %82 = sbr.rel (0) target = $region25
    $region24: #{tpu_custom_call.1} parent=1 // pred_region
      _
    $region25: #{tpu_custom_call.1} parent=1 // pred_fallthru
      _
    // Predicated region
    $region26: #{tpu_custom_call.1} parent=1 // pred_check
      _
    $region27: #{tpu_custom_call.1} parent=1 // pred_check_branch
      %84 = sbr.rel (0) target = $region29
    $region28: #{tpu_custom_call.1} parent=1 // pred_region
      _
    $region29: #{tpu_custom_call.1} parent=1 // pred_fallthru
      _
    // Predicated region
    $region30: #{tpu_custom_call.1} parent=1 // pred_check
      _
    $region31: #{tpu_custom_call.1} parent=1 // pred_check_branch
      %86 = sbr.rel (0) target = $region33
    $region32: #{tpu_custom_call.1} parent=1 // pred_region
      _
    $region33: #{tpu_custom_call.1} parent=1 // pred_fallthru
      _
    // Predicated region
    $region34: #{tpu_custom_call.1} parent=1 // pred_check
      _
    $region35: #{tpu_custom_call.1} parent=1 // pred_check_branch
      %88 = sbr.rel (0) target = $region37
    $region36: #{tpu_custom_call.1} parent=1 // pred_region
      %90 = dma.done [#allocation3], 128
    $region37: #{tpu_custom_call.1} parent=1 // pred_fallthru
      _
    // Predicated region
    $region38: #{tpu_custom_call.1} parent=1 // pred_check
      _
    $region39: #{tpu_custom_call.1} parent=1 // pred_check_branch
      %92 = sbr.rel (0) target = $region41
    $region40: #{tpu_custom_call.1} parent=1 // pred_region
      %94 = dma.done [#allocation6], 128
    $region41: #{tpu_custom_call.1} parent=1 // pred_fallthru
      _
    // Predicated region
    $region42: #{tpu_custom_call.1} parent=1 // pred_check
      _
    $region43: #{tpu_custom_call.1} parent=1 // pred_check_branch
      %96 = sbr.rel (0) target = $region45
    $region44: #{tpu_custom_call.1} parent=1 // pred_region
      %98 = dma.done [#allocation6], 1024
    $region45: #{tpu_custom_call.1} parent=1 // pred_fallthru
      _
    // Predicated region
    $region46: #{tpu_custom_call.1} parent=1 // pred_check
      _
    $region47: #{tpu_custom_call.1} parent=1 // pred_check_branch
      %100 = sbr.rel (0) target = $region49
    $region48: #{tpu_custom_call.1} parent=1 // pred_region
      %102 = dma.done [#allocation9], 1024
    $region49: #{tpu_custom_call.1} parent=1 // pred_fallthru
      _
    // Predicated region
    $region50: #{tpu_custom_call.1} parent=1 // pred_check
      _
    $region51: #{tpu_custom_call.1} parent=1 // pred_check_branch
      %104 = sbr.rel (0) target = $region53
    $region52: #{tpu_custom_call.1} parent=1 // pred_region
      %106 = dma.done [#allocation9], 1024
    $region53: #{tpu_custom_call.1} parent=1 // pred_fallthru
      _
    %v107 = vld [vmem:[#allocation2] sm:$0xff]
    %v108 = vld [vmem:[#allocation5] sm:$0xff]
    %v109 = vld [vmem:[#allocation7] sm:$0xf]
    %v110 = vld [vmem:[#allocation7 + $0x4] sm:$0xf]
    %v111 = vld [vmem:[#allocation7 + $0x8] sm:$0xf]
    %v112 = vld [vmem:[#allocation7 + $0xc] sm:$0xf]
    %v113 = vld [vmem:[#allocation7 + $0x10] sm:$0xf]
    %v114 = vld [vmem:[#allocation7 + $0x14] sm:$0xf]
    %v115 = vld [vmem:[#allocation7 + $0x18] sm:$0xf]
    %v116 = vld [vmem:[#allocation7 + $0x1c] sm:$0xf]
    %v117 = vld [vmem:[#allocation7 + $0x20] sm:$0xf]
    %v118 = vld [vmem:[#allocation7 + $0x24] sm:$0xf]
    %v119 = vld [vmem:[#allocation7 + $0x28] sm:$0xf]
    %v120 = vld [vmem:[#allocation7 + $0x2c] sm:$0xf]
    %v121 = vld [vmem:[#allocation7 + $0x30] sm:$0xf]
    %v122 = vld [vmem:[#allocation7 + $0x34] sm:$0xf]
    %v123 = vld [vmem:[#allocation7 + $0x38] sm:$0xf]
    %v124 = vld [vmem:[#allocation7 + $0x3c] sm:$0xf]
    %v125 = vld [vmem:[#allocation8] sm:$0xf]
    %v126 = vld [vmem:[#allocation8 + $0x4] sm:$0xf]
    %v127 = vld [vmem:[#allocation8 + $0x8] sm:$0xf]
    %v128 = vld [vmem:[#allocation8 + $0xc] sm:$0xf]
    %v129 = vld [vmem:[#allocation8 + $0x10] sm:$0xf]
    %v130 = vld [vmem:[#allocation8 + $0x14] sm:$0xf]
    %v131 = vld [vmem:[#allocation8 + $0x18] sm:$0xf]
    %v132 = vld [vmem:[#allocation8 + $0x1c] sm:$0xf]
    %v133 = vld [vmem:[#allocation8 + $0x20] sm:$0xf]
    %v134 = vld [vmem:[#allocation8 + $0x24] sm:$0xf]
    %v135 = vld [vmem:[#allocation8 + $0x28] sm:$0xf]
    %v136 = vld [vmem:[#allocation8 + $0x2c] sm:$0xf]
    %v137 = vld [vmem:[#allocation8 + $0x30] sm:$0xf]
    %v138 = vld [vmem:[#allocation8 + $0x34] sm:$0xf]
    %v139 = vld [vmem:[#allocation8 + $0x38] sm:$0xf]
    %v140 = vld [vmem:[#allocation8 + $0x3c] sm:$0xf]
    %v141 = vld [vmem:[#allocation10] sm:$0xf]
    %v142 = vld [vmem:[#allocation10 + $0x4] sm:$0xf]
    %v143 = vld [vmem:[#allocation10 + $0x8] sm:$0xf]
    %v144 = vld [vmem:[#allocation10 + $0xc] sm:$0xf]
    %v145 = vld [vmem:[#allocation10 + $0x10] sm:$0xf]
    %v146 = vld [vmem:[#allocation10 + $0x14] sm:$0xf]
    %v147 = vld [vmem:[#allocation10 + $0x18] sm:$0xf]
    %v148 = vld [vmem:[#allocation10 + $0x1c] sm:$0xf]
    %v149 = vld [vmem:[#allocation10 + $0x20] sm:$0xf]
    %v150 = vld [vmem:[#allocation10 + $0x24] sm:$0xf]
    %v151 = vld [vmem:[#allocation10 + $0x28] sm:$0xf]
    %v152 = vld [vmem:[#allocation10 + $0x2c] sm:$0xf]
    %v153 = vld [vmem:[#allocation10 + $0x30] sm:$0xf]
    %v154 = vld [vmem:[#allocation10 + $0x34] sm:$0xf]
    %v155 = vld [vmem:[#allocation10 + $0x38] sm:$0xf]
    %v156 = vld [vmem:[#allocation10 + $0x3c] sm:$0xf]
    %v157 = vld [vmem:[%s5] sm:$0x1]
    %v159 = vperm.slane %v157, 0
    %v161 = vld [vmem:[%s6] sm:$0x1]
    %v163 = vperm.slane %v161, 0
    %v165 = vld [vmem:[%s7] sm:$0x1]
    %v167 = vperm.slane %v165, 0
    %v169 = vpack.c.bf16 %v107, %v107
    %v186 = vunpack.c.l.b16 %v109
    %v187 = vunpack.c.l.b16 %v110
    %v188 = vunpack.c.l.b16 %v111
    %v189 = vunpack.c.l.b16 %v112
    %v190 = vunpack.c.l.b16 %v113
    %v191 = vunpack.c.l.b16 %v114
    %v192 = vunpack.c.l.b16 %v115
    %v193 = vunpack.c.l.b16 %v116
    %v194 = vunpack.c.l.b16 %v117
    %v195 = vunpack.c.l.b16 %v118
    %v196 = vunpack.c.l.b16 %v119
    %v197 = vunpack.c.l.b16 %v120
    %v198 = vunpack.c.l.b16 %v121
    %v199 = vunpack.c.l.b16 %v122
    %v200 = vunpack.c.l.b16 %v123
    %v201 = vunpack.c.l.b16 %v124
    %v202 = vpack.c.b16 %v187, %v186
    %v203 = vpack.c.b16 %v189, %v188
    %v204 = vpack.c.b16 %v191, %v190
    %v205 = vpack.c.b16 %v193, %v192
    %v206 = vpack.c.b16 %v195, %v194
    %v207 = vpack.c.b16 %v197, %v196
    %v208 = vpack.c.b16 %v199, %v198
    %v209 = vpack.c.b16 %v201, %v200
    %218 = vmatpush.bf16.msra.mxu0 %v209
    %219 = vmatpush.bf16.msra.mxu0 %v208
    %220 = vmatpush.bf16.msra.mxu0 %v207
    %221 = vmatpush.bf16.msra.mxu0 %v206
    %222 = vmatpush.bf16.msra.mxu0 %v205
    %223 = vmatpush.bf16.msra.mxu0 %v204
    %224 = vmatpush.bf16.msra.mxu0 %v203
    %225 = vmatpush.bf16.msra.mxu0 %v202
    %226 = vmatmul.bf16.gmra.mxu0 %v169
    %v227 = vpop.f32.mrf.mxu0
    %v228 = vadd.f32 0.0, %v227
    %v229 = vpop.f32.mrf.mxu0
    %230 = vdwg.mxu0
    %v231 = vpack.c.bf16 %v108, %v108
    %v248 = vunpack.c.l.b16 %v125
    %v249 = vunpack.c.l.b16 %v126
    %v250 = vunpack.c.l.b16 %v127
    %v251 = vunpack.c.l.b16 %v128
    %v252 = vunpack.c.l.b16 %v129
    %v253 = vunpack.c.l.b16 %v130
    %v254 = vunpack.c.l.b16 %v131
    %v255 = vunpack.c.l.b16 %v132
    %v256 = vunpack.c.l.b16 %v133
    %v257 = vunpack.c.l.b16 %v134
    %v258 = vunpack.c.l.b16 %v135
    %v259 = vunpack.c.l.b16 %v136
    %v260 = vunpack.c.l.b16 %v137
    %v261 = vunpack.c.l.b16 %v138
    %v262 = vunpack.c.l.b16 %v139
    %v263 = vunpack.c.l.b16 %v140
    %v264 = vpack.c.b16 %v249, %v248
    %v265 = vpack.c.b16 %v251, %v250
    %v266 = vpack.c.b16 %v253, %v252
    %v267 = vpack.c.b16 %v255, %v254
    %v268 = vpack.c.b16 %v257, %v256
    %v269 = vpack.c.b16 %v259, %v258
    %v270 = vpack.c.b16 %v261, %v260
    %v271 = vpack.c.b16 %v263, %v262
    %280 = vmatpush.bf16.msra.mxu0 %v271
    %281 = vmatpush.bf16.msra.mxu0 %v270
    %282 = vmatpush.bf16.msra.mxu0 %v269
    %283 = vmatpush.bf16.msra.mxu0 %v268
    %284 = vmatpush.bf16.msra.mxu0 %v267
    %285 = vmatpush.bf16.msra.mxu0 %v266
    %286 = vmatpush.bf16.msra.mxu0 %v265
    %287 = vmatpush.bf16.msra.mxu0 %v264
    %288 = vmatmul.bf16.gmra.mxu0 %v231
    %v289 = vpop.f32.mrf.mxu0
    %v290 = vadd.f32 0.0, %v289
    %v291 = vpop.f32.mrf.mxu0
    %292 = vdwg.mxu0
    %v293 = vmul.f32 %v228, %v290
    %v294 = vpack.c.bf16 %v293, %v293
    %v311 = vunpack.c.l.b16 %v141
    %v312 = vunpack.c.l.b16 %v142
    %v313 = vunpack.c.l.b16 %v143
    %v314 = vunpack.c.l.b16 %v144
    %v315 = vunpack.c.l.b16 %v145
    %v316 = vunpack.c.l.b16 %v146
    %v317 = vunpack.c.l.b16 %v147
    %v318 = vunpack.c.l.b16 %v148
    %v319 = vunpack.c.l.b16 %v149
    %v320 = vunpack.c.l.b16 %v150
    %v321 = vunpack.c.l.b16 %v151
    %v322 = vunpack.c.l.b16 %v152
    %v323 = vunpack.c.l.b16 %v153
    %v324 = vunpack.c.l.b16 %v154
    %v325 = vunpack.c.l.b16 %v155
    %v326 = vunpack.c.l.b16 %v156
    %v327 = vpack.c.b16 %v312, %v311
    %v328 = vpack.c.b16 %v314, %v313
    %v329 = vpack.c.b16 %v316, %v315
    %v330 = vpack.c.b16 %v318, %v317
    %v331 = vpack.c.b16 %v320, %v319
    %v332 = vpack.c.b16 %v322, %v321
    %v333 = vpack.c.b16 %v324, %v323
    %v334 = vpack.c.b16 %v326, %v325
    %343 = vmatpush.bf16.xpose.msra.mxu0 %v334
    %344 = vmatpush.bf16.xpose.msra.mxu0 %v333
    %345 = vmatpush.bf16.xpose.msra.mxu0 %v332
    %346 = vmatpush.bf16.xpose.msra.mxu0 %v331
    %347 = vmatpush.bf16.xpose.msra.mxu0 %v330
    %348 = vmatpush.bf16.xpose.msra.mxu0 %v329
    %349 = vmatpush.bf16.xpose.msra.mxu0 %v328
    %350 = vmatpush.bf16.xpose.msra.mxu0 %v327
    %351 = vmatmul.bf16.gmra.mxu0 %v294
    %v352 = vpop.f32.mrf.mxu0
    %v353 = vadd.f32 %v167, %v352
    %v354 = vpop.f32.mrf.mxu0
    %355 = vdwg.mxu0
    %v356 = vsub.f32 0.0, %v353
    %v357 = vmul.f32 %v356, 1.442695
    %v358 = vpow.pop %v357
    %v359 = vadd.f32 %v358, 1.0
    %v360 = vrcp.pop %v359
    %v361 = vpack.c.bf16 %v360, %v360
    %362 = vmatpush.bf16.msra.mxu0 %v334
    %363 = vmatpush.bf16.msra.mxu0 %v333
    %364 = vmatpush.bf16.msra.mxu0 %v332
    %365 = vmatpush.bf16.msra.mxu0 %v331
    %366 = vmatpush.bf16.msra.mxu0 %v330
    %367 = vmatpush.bf16.msra.mxu0 %v329
    %368 = vmatpush.bf16.msra.mxu0 %v328
    %369 = vmatpush.bf16.msra.mxu0 %v327
    %370 = vmatmul.bf16.gmra.mxu0 %v361
    %v371 = vpop.f32.mrf.mxu0
    %v372 = vadd.f32 0.0, %v371
    %v373 = vpop.f32.mrf.mxu0
    %374 = vdwg.mxu0
    %v375 = vmul.f32 %v228, %v372
    %v376 = vpack.c.bf16 %v375, %v375
    %377 = vmatpush.bf16.xpose.msra.mxu0 %v271
    %378 = vmatpush.bf16.xpose.msra.mxu0 %v270
    %379 = vmatpush.bf16.xpose.msra.mxu0 %v269
    %380 = vmatpush.bf16.xpose.msra.mxu0 %v268
    %381 = vmatpush.bf16.xpose.msra.mxu0 %v267
    %382 = vmatpush.bf16.xpose.msra.mxu0 %v266
    %383 = vmatpush.bf16.xpose.msra.mxu0 %v265
    %384 = vmatpush.bf16.xpose.msra.mxu0 %v264
    %385 = vmatmul.bf16.gmra.mxu0 %v376
    %v386 = vpop.f32.mrf.mxu0
    %v387 = vadd.f32 %v163, %v386
    %v388 = vpop.f32.mrf.mxu0
    %389 = vdwg.mxu0
    %v390 = vsub.f32 0.0, %v387
    %v391 = vmul.f32 %v390, 1.442695
    %v392 = vpow.pop %v391
    %v393 = vadd.f32 %v392, 1.0
    %v394 = vrcp.pop %v393
    %v395 = vmul.f32 %v290, %v372
    %v396 = vpack.c.bf16 %v395, %v395
    %397 = vmatpush.bf16.xpose.msra.mxu0 %v209
    %398 = vmatpush.bf16.xpose.msra.mxu0 %v208
    %399 = vmatpush.bf16.xpose.msra.mxu0 %v207
    %400 = vmatpush.bf16.xpose.msra.mxu0 %v206
    %401 = vmatpush.bf16.xpose.msra.mxu0 %v205
    %402 = vmatpush.bf16.xpose.msra.mxu0 %v204
    %403 = vmatpush.bf16.xpose.msra.mxu0 %v203
    %404 = vmatpush.bf16.xpose.msra.mxu0 %v202
    %405 = vmatmul.bf16.gmra.mxu0 %v396
    %v406 = vpop.f32.mrf.mxu0
    %v407 = vadd.f32 %v159, %v406
    %v408 = vpop.f32.mrf.mxu0
    %409 = vdwg.mxu0
    %v410 = vsub.f32 0.0, %v407
    %v411 = vmul.f32 %v410, 1.442695
    %v412 = vpow.pop %v411
    %v413 = vadd.f32 %v412, 1.0
    %v414 = vrcp.pop %v413
    %415 = vst [vmem:[#allocation11] sm:$0xff] %v414
    %416 = vst [vmem:[#allocation12] sm:$0xff] %v394
    // Predicated region
    $region54: #{tpu_custom_call.1} parent=1 // pred_check
      _
    $region55: #{tpu_custom_call.1} parent=1 // pred_check_branch
      %418 = sbr.rel (0) target = $region57
    $region56: #{tpu_custom_call.1} parent=1 // pred_region
      %420 = vsyncadd [#allocation4], 0
      %s422 = sshll.u32 [#allocation11], 4
      %s423 = int_to_ptr.vmem [resolvable:$true] %s422
      %s424 = sshll.u32 %s8, 4
      %s425 = int_to_ptr.hbm [resolvable:$true] %s424
      %427 = dma.vmem_to_hbm [thread:$0]  %s423, 128, %s425, [#allocation4]
    $region57: #{tpu_custom_call.1} parent=1 // pred_fallthru
      _
    // Predicated region
    $region58: #{tpu_custom_call.1} parent=1 // pred_check
      _
    $region59: #{tpu_custom_call.1} parent=1 // pred_check_branch
      %429 = sbr.rel (0) target = $region61
    $region60: #{tpu_custom_call.1} parent=1 // pred_region
      %431 = vsyncadd [#allocation13], 0
      %s433 = sshll.u32 [#allocation12], 4
      %s434 = int_to_ptr.vmem [resolvable:$true] %s433
      %s435 = sshll.u32 %s9, 4
      %s436 = int_to_ptr.hbm [resolvable:$true] %s435
      %438 = dma.vmem_to_hbm [thread:$0]  %s434, 128, %s436, [#allocation13]
    $region61: #{tpu_custom_call.1} parent=1 // pred_fallthru
      _
    // Predicated region
    $region62: #{tpu_custom_call.1} parent=1 // pred_check
      _
    $region63: #{tpu_custom_call.1} parent=1 // pred_check_branch
      %440 = sbr.rel (0) target = $region65
    $region64: #{tpu_custom_call.1} parent=1 // pred_region
      %442 = dma.done [#allocation4], 128
    $region65: #{tpu_custom_call.1} parent=1 // pred_fallthru
      _
    // Predicated region
    $region66: #{tpu_custom_call.1} parent=1 // pred_check
      _
    $region67: #{tpu_custom_call.1} parent=1 // pred_check_branch
      %444 = sbr.rel (0) target = $region69
    $region68: #{tpu_custom_call.1} parent=1 // pred_region
      %446 = dma.done [#allocation13], 128
    $region69: #{tpu_custom_call.1} parent=1 // pred_fallthru
      _
    %447 = vsyncpa [#allocation3], 1
    %448 = vsyncpa [#allocation6], 1
    %449 = vsyncpa [#allocation9], 1
    %450 = vsyncpa [#allocation4], 1
    %451 = vsyncpa [#allocation13], 1

</llo_original>
